<compile_context>
chip_gen: v7x
topology: tpu7x:2x2x1
jax: 0.10.0
libtpu: 0.0.40
codegen_flags: <defaults>
</compile_context>

<pallas_src>
import math

import jax
import jax.numpy as jnp
from jax.experimental import pallas as pl
from jax.experimental.pallas import tpu as pltpu

IN, H1, H2, H3, OUT = 8, 128, 64, 128, 4
H2_PAD = 128  # 64-wide hidden layer padded to a full lane width (exact).


def _round_up(x, m):
    return ((x + m - 1) // m) * m


def qnet_kernel(x_ref,
                w1_ref, b1_ref,
                w2_ref, b2_ref,
                w3_ref, b3_ref,
                w4_ref, b4_ref,
                o_ref):
    """Fused MLP: 4 matmuls + 3 ReLUs on one (TB, *) batch tile.

    Matmul inputs are cast to the weights' dtype (f32 or bf16); accumulation,
    bias add and ReLU are always f32.
    """
    def dense(h, w_ref, b_ref, relu):
        y = jnp.dot(h.astype(w_ref.dtype), w_ref[...],
                    preferred_element_type=jnp.float32)
        y = y + b_ref[...]
        return jnp.maximum(y, 0.0) if relu else y

    h = dense(x_ref[...], w1_ref, b1_ref, relu=True)   # (TB, 128)
    h = dense(h, w2_ref, b2_ref, relu=True)            # (TB, 128)  (padded 64)
    h = dense(h, w3_ref, b3_ref, relu=True)            # (TB, 128)
    h = dense(h, w4_ref, b4_ref, relu=False)           # (TB, 4)
    o_ref[...] = h.astype(o_ref.dtype)


def prepare_params(params, use_bf16=False):
    """Pad the 64-wide hidden layer to 128 (exact) and optionally cast weights
    to bf16 for native MXU throughput (biases stay f32)."""
    w1, b1 = params["w1"], params["b1"]
    w2, b2 = params["w2"], params["b2"]
    w3, b3 = params["w3"], params["b3"]
    w4, b4 = params["w4"], params["b4"]

    w2p = jnp.pad(w2, ((0, 0), (0, H2_PAD - H2)))      # (128, 128), zero cols
    b2p = jnp.pad(b2, ((0, 0), (0, H2_PAD - H2)))      # (1, 128),   zero cols
    w3p = jnp.pad(w3, ((0, H2_PAD - H2), (0, 0)))      # (128, 128), zero rows

    wdt = jnp.bfloat16 if use_bf16 else jnp.float32
    ws = (w1.astype(wdt), w2p.astype(wdt), w3p.astype(wdt), w4.astype(wdt))
    bs = (b1.astype(jnp.float32), b2p.astype(jnp.float32),
          b3.astype(jnp.float32), b4.astype(jnp.float32))
    return ws, bs


def q_net_forward(state, params, *, block_b=256, use_bf16=False):
    """state: (B, 8) float32 -> (B, 4) float32 Q-values."""
    B = state.shape[0]
    (w1, w2, w3, w4), (b1, b2, b3, b4) = prepare_params(params, use_bf16)

    # Batch tile: full (8-aligned) batch when small, otherwise block_b rows.
    tb = min(block_b, _round_up(B, 8))
    b_pad = _round_up(B, tb)
    x = state
    if b_pad != B:
        x = jnp.pad(x, ((0, b_pad - B), (0, 0)))

    grid = (b_pad // tb,)

    # Weights/biases: one full-array block, constant index_map -> VMEM-resident.
    const = lambda a: pl.BlockSpec(a.shape, lambda i: (0, 0))

    out = pl.pallas_call(
        qnet_kernel,
        out_shape=jax.ShapeDtypeStruct((b_pad, OUT), jnp.float32),
        grid=grid,
        in_specs=[pl.BlockSpec((tb, IN), lambda i: (i, 0)),
                  const(w1), const(b1),
                  const(w2), const(b2),
                  const(w3), const(b3),
                  const(w4), const(b4)],
        out_specs=pl.BlockSpec((tb, OUT), lambda i: (i, 0)),
        compiler_params=pltpu.CompilerParams(
            dimension_semantics=("parallel",)),
    )(x, w1, b1, w2, b2, w3, b3, w4, b4)

    if b_pad != B:
        out = out[:B]
    return out
    # TODO(synk): if this net is only used for action selection, fuse the
    # argmax over the 4 Q-values (and epsilon-greedy via pltpu.prng_*) into the
    # kernel epilogue to avoid a second op + HBM round-trip.


def init_params(key):
    """Deterministic init mirroring PyTorch nn.Linear default:
    U(-1/sqrt(fan_in), 1/sqrt(fan_in)) for both weight and bias."""
    dims = [(IN, H1), (H1, H2), (H2, H3), (H3, OUT)]
    params = {}
    for i, (fan_in, fan_out) in enumerate(dims, start=1):
        key, kw, kb = jax.random.split(key, 3)
        bound = 1.0 / math.sqrt(fan_in)
        params[f"w{i}"] = jax.random.uniform(
            kw, (fan_in, fan_out), jnp.float32, minval=-bound, maxval=bound)
        params[f"b{i}"] = jax.random.uniform(
            kb, (1, fan_out), jnp.float32, minval=-bound, maxval=bound)
    return params


def reference_forward(state, params):
    h = state
    for i in range(1, 4):
        h = jnp.maximum(h @ params[f"w{i}"] + params[f"b{i}"], 0.0)
    return h @ params["w4"] + params["b4"]


if __name__ == "__main__":
    key = jax.random.PRNGKey(0)
    key, k_small, k_big = jax.random.split(key, 3)
    params = init_params(key)

    # Small batch (single grid point), f32 path: should match reference tightly.
    state_small = jax.random.normal(k_small, (8, IN), jnp.float32)
    out_small = jax.block_until_ready(q_net_forward(state_small, params))
    ref_small = reference_forward(state_small, params)
    assert out_small.shape == (8, OUT)
    assert jnp.allclose(out_small, ref_small, atol=1e-4, rtol=1e-4)

    # Larger, non-multiple batch: exercises grid > 1, batch padding, and the
    # lane-padded middle layers (still exact in f32).
    state_big = jax.random.normal(k_big, (1000, IN), jnp.float32)
    out_big = jax.block_until_ready(q_net_forward(state_big, params))
    ref_big = reference_forward(state_big, params)
    assert out_big.shape == (1000, OUT)
    assert jnp.allclose(out_big, ref_big, atol=1e-4, rtol=1e-4)

    # bf16 MXU path (f32 accumulation): small, bounded numerics drift.
    out_bf16 = jax.block_until_ready(
        q_net_forward(state_big, params, use_bf16=True))
    assert jnp.allclose(out_bf16, ref_big, atol=3e-2, rtol=3e-2)

    print("KERNEL_OK")
</pallas_src>

<mosaic_0001>
module attributes {stable_mosaic.version = 11 : i64} {
  func.func @qnet_kernel(%arg0: i32, %arg1: memref<8x8xf32, #tpu.memory_space<vmem>>, %arg2: memref<8x128xf32, #tpu.memory_space<vmem>>, %arg3: memref<1x128xf32, #tpu.memory_space<vmem>>, %arg4: memref<128x128xf32, #tpu.memory_space<vmem>>, %arg5: memref<1x128xf32, #tpu.memory_space<vmem>>, %arg6: memref<128x128xf32, #tpu.memory_space<vmem>>, %arg7: memref<1x128xf32, #tpu.memory_space<vmem>>, %arg8: memref<128x4xf32, #tpu.memory_space<vmem>>, %arg9: memref<1x4xf32, #tpu.memory_space<vmem>>, %arg10: memref<8x4xf32, #tpu.memory_space<vmem>>) attributes {dimension_semantics = [#tpu.dimension_semantics<parallel>], iteration_bounds = array<i64: 1>, scalar_prefetch = 0 : i64, scratch_operands = 0 : i64, tpu.core_type = #tpu.core_type<tc>, window_params = [{transform_indices = @transform_0, window_bounds = array<i64: 8, 8>}, {pipeline_mode = #tpu.pipeline_mode<synchronous>, transform_indices = @transform_1, window_bounds = array<i64: 8, 128>}, {pipeline_mode = #tpu.pipeline_mode<synchronous>, transform_indices = @transform_2, window_bounds = array<i64: 1, 128>}, {pipeline_mode = #tpu.pipeline_mode<synchronous>, transform_indices = @transform_3, window_bounds = array<i64: 128, 128>}, {pipeline_mode = #tpu.pipeline_mode<synchronous>, transform_indices = @transform_4, window_bounds = array<i64: 1, 128>}, {pipeline_mode = #tpu.pipeline_mode<synchronous>, transform_indices = @transform_5, window_bounds = array<i64: 128, 128>}, {pipeline_mode = #tpu.pipeline_mode<synchronous>, transform_indices = @transform_6, window_bounds = array<i64: 1, 128>}, {pipeline_mode = #tpu.pipeline_mode<synchronous>, transform_indices = @transform_7, window_bounds = array<i64: 128, 4>}, {pipeline_mode = #tpu.pipeline_mode<synchronous>, transform_indices = @transform_8, window_bounds = array<i64: 1, 4>}, {transform_indices = @transform_9, window_bounds = array<i64: 8, 4>}]} {
    %c0 = arith.constant 0 : index
    %c0_0 = arith.constant 0 : index
    %0 = vector.load %arg1[%c0, %c0_0] : memref<8x8xf32, #tpu.memory_space<vmem>>, vector<8x8xf32>
    %c0_1 = arith.constant 0 : index
    %c0_2 = arith.constant 0 : index
    %1 = vector.load %arg2[%c0_1, %c0_2] : memref<8x128xf32, #tpu.memory_space<vmem>>, vector<8x128xf32>
    %cst = arith.constant dense<0.000000e+00> : vector<8x128xf32>
    %2 = tpu.matmul %0, %1, %cst {dimension_numbers = #tpu.dot_dimension_numbers<[1], [0], [0], [1], [0, 0, 1, 1], [], []>} : vector<8x8xf32>, vector<8x128xf32>, vector<8x128xf32> -> vector<8x128xf32>
    %c0_3 = arith.constant 0 : index
    %c0_4 = arith.constant 0 : index
    %3 = vector.load %arg3[%c0_3, %c0_4] : memref<1x128xf32, #tpu.memory_space<vmem>>, vector<1x128xf32>
    %4 = vector.broadcast %3 : vector<1x128xf32> to vector<8x128xf32>
    %5 = arith.addf %2, %4 : vector<8x128xf32>
    %cst_5 = arith.constant 0.000000e+00 : f32
    %6 = vector.broadcast %cst_5 : f32 to vector<8x128xf32>
    %7 = arith.maximumf %5, %6 : vector<8x128xf32>
    %c0_6 = arith.constant 0 : index
    %c0_7 = arith.constant 0 : index
    %8 = vector.load %arg4[%c0_6, %c0_7] : memref<128x128xf32, #tpu.memory_space<vmem>>, vector<128x128xf32>
    %cst_8 = arith.constant dense<0.000000e+00> : vector<8x128xf32>
    %9 = tpu.matmul %7, %8, %cst_8 {dimension_numbers = #tpu.dot_dimension_numbers<[1], [0], [0], [1], [0, 0, 1, 1], [], []>} : vector<8x128xf32>, vector<128x128xf32>, vector<8x128xf32> -> vector<8x128xf32>
    %c0_9 = arith.constant 0 : index
    %c0_10 = arith.constant 0 : index
    %10 = vector.load %arg5[%c0_9, %c0_10] : memref<1x128xf32, #tpu.memory_space<vmem>>, vector<1x128xf32>
    %11 = vector.broadcast %10 : vector<1x128xf32> to vector<8x128xf32>
    %12 = arith.addf %9, %11 : vector<8x128xf32>
    %cst_11 = arith.constant 0.000000e+00 : f32
    %13 = vector.broadcast %cst_11 : f32 to vector<8x128xf32>
    %14 = arith.maximumf %12, %13 : vector<8x128xf32>
    %c0_12 = arith.constant 0 : index
    %c0_13 = arith.constant 0 : index
    %15 = vector.load %arg6[%c0_12, %c0_13] : memref<128x128xf32, #tpu.memory_space<vmem>>, vector<128x128xf32>
    %cst_14 = arith.constant dense<0.000000e+00> : vector<8x128xf32>
    %16 = tpu.matmul %14, %15, %cst_14 {dimension_numbers = #tpu.dot_dimension_numbers<[1], [0], [0], [1], [0, 0, 1, 1], [], []>} : vector<8x128xf32>, vector<128x128xf32>, vector<8x128xf32> -> vector<8x128xf32>
    %c0_15 = arith.constant 0 : index
    %c0_16 = arith.constant 0 : index
    %17 = vector.load %arg7[%c0_15, %c0_16] : memref<1x128xf32, #tpu.memory_space<vmem>>, vector<1x128xf32>
    %18 = vector.broadcast %17 : vector<1x128xf32> to vector<8x128xf32>
    %19 = arith.addf %16, %18 : vector<8x128xf32>
    %cst_17 = arith.constant 0.000000e+00 : f32
    %20 = vector.broadcast %cst_17 : f32 to vector<8x128xf32>
    %21 = arith.maximumf %19, %20 : vector<8x128xf32>
    %c0_18 = arith.constant 0 : index
    %c0_19 = arith.constant 0 : index
    %22 = vector.load %arg8[%c0_18, %c0_19] : memref<128x4xf32, #tpu.memory_space<vmem>>, vector<128x4xf32>
    %cst_20 = arith.constant dense<0.000000e+00> : vector<8x4xf32>
    %23 = tpu.matmul %21, %22, %cst_20 {dimension_numbers = #tpu.dot_dimension_numbers<[1], [0], [0], [1], [0, 0, 1, 1], [], []>} : vector<8x128xf32>, vector<128x4xf32>, vector<8x4xf32> -> vector<8x4xf32>
    %c0_21 = arith.constant 0 : index
    %c0_22 = arith.constant 0 : index
    %24 = vector.load %arg9[%c0_21, %c0_22] : memref<1x4xf32, #tpu.memory_space<vmem>>, vector<1x4xf32>
    %25 = vector.broadcast %24 : vector<1x4xf32> to vector<8x4xf32>
    %26 = arith.addf %23, %25 : vector<8x4xf32>
    %c0_23 = arith.constant 0 : index
    %c0_24 = arith.constant 0 : index
    %27 = vector.load %arg10[%c0_23, %c0_24] : memref<8x4xf32, #tpu.memory_space<vmem>>, vector<8x4xf32>
    tpu.vector_store %arg10[%c0_23, %c0_24], %26 {strides = array<i32>} : memref<8x4xf32, #tpu.memory_space<vmem>>, vector<8x4xf32>,
    return
  }
  func.func @transform_0(%arg0: i32) -> (i32, i32) {
    %c0_i32 = arith.constant 0 : i32
    %c0_i32_0 = arith.constant 0 : i32
    return %arg0, %c0_i32 : i32, i32
  }
  func.func @transform_1(%arg0: i32) -> (i32, i32) {
    %c0_i32 = arith.constant 0 : i32
    %c0_i32_0 = arith.constant 0 : i32
    %c0_i32_1 = arith.constant 0 : i32
    return %c0_i32, %c0_i32_0 : i32, i32
  }
  func.func @transform_2(%arg0: i32) -> (i32, i32) {
    %c0_i32 = arith.constant 0 : i32
    %c0_i32_0 = arith.constant 0 : i32
    %c0_i32_1 = arith.constant 0 : i32
    return %c0_i32, %c0_i32_0 : i32, i32
  }
  func.func @transform_3(%arg0: i32) -> (i32, i32) {
    %c0_i32 = arith.constant 0 : i32
    %c0_i32_0 = arith.constant 0 : i32
    %c0_i32_1 = arith.constant 0 : i32
    return %c0_i32, %c0_i32_0 : i32, i32
  }
  func.func @transform_4(%arg0: i32) -> (i32, i32) {
    %c0_i32 = arith.constant 0 : i32
    %c0_i32_0 = arith.constant 0 : i32
    %c0_i32_1 = arith.constant 0 : i32
    return %c0_i32, %c0_i32_0 : i32, i32
  }
  func.func @transform_5(%arg0: i32) -> (i32, i32) {
    %c0_i32 = arith.constant 0 : i32
    %c0_i32_0 = arith.constant 0 : i32
    %c0_i32_1 = arith.constant 0 : i32
    return %c0_i32, %c0_i32_0 : i32, i32
  }
  func.func @transform_6(%arg0: i32) -> (i32, i32) {
    %c0_i32 = arith.constant 0 : i32
    %c0_i32_0 = arith.constant 0 : i32
    %c0_i32_1 = arith.constant 0 : i32
    return %c0_i32, %c0_i32_0 : i32, i32
  }
  func.func @transform_7(%arg0: i32) -> (i32, i32) {
    %c0_i32 = arith.constant 0 : i32
    %c0_i32_0 = arith.constant 0 : i32
    %c0_i32_1 = arith.constant 0 : i32
    return %c0_i32, %c0_i32_0 : i32, i32
  }
  func.func @transform_8(%arg0: i32) -> (i32, i32) {
    %c0_i32 = arith.constant 0 : i32
    %c0_i32_0 = arith.constant 0 : i32
    %c0_i32_1 = arith.constant 0 : i32
    return %c0_i32, %c0_i32_0 : i32, i32
  }
  func.func @transform_9(%arg0: i32) -> (i32, i32) {
    %c0_i32 = arith.constant 0 : i32
    %c0_i32_0 = arith.constant 0 : i32
    return %arg0, %c0_i32 : i32, i32
  }
}

</mosaic_0001>

<llo_original>
// kernel: tpu_custom_call.1
$region0: #{tpu_custom_call.1}
  #allocation0 [shape = 'u32[]', space=smem, size = 0x4, offset = 0x4, fixed_abs, tag = 'smem constant byte address 0x4 - core index']
  #allocation1 [shape = 'u32[144,128]{1,0:T(1,128)}', space=vmem, size = 0x12000, scoped, tag = 'internal scratch']
  %s0 = inlined_call_operand.vmem [shape: f32[8,8], index: 0, kind: input, shape index: {}]
  %s1 = inlined_call_operand.hbm [shape: f32[8,128], index: 1, kind: input, shape index: {}]
  %s2 = inlined_call_operand.vmem [shape: f32[1,128], index: 2, kind: input, shape index: {}]
  %s3 = inlined_call_operand.vmem [shape: f32[128,128], index: 3, kind: input, shape index: {}]
  %s4 = inlined_call_operand.vmem [shape: f32[1,128], index: 4, kind: input, shape index: {}]
  %s5 = inlined_call_operand.hbm [shape: f32[128,128], index: 5, kind: input, shape index: {}]
  %s6 = inlined_call_operand.vmem [shape: f32[1,128], index: 6, kind: input, shape index: {}]
  %s7 = inlined_call_operand.vmem [shape: f32[128,4], index: 7, kind: input, shape index: {}]
  %s8 = inlined_call_operand.vmem [shape: f32[1,4], index: 8, kind: input, shape index: {}]
  %s9 = inlined_call_operand.vmem [shape: f32[8,4], index: 9, kind: output, shape index: {}]
  %s10 = sld [smem:[#allocation0]]
  $region54: #{tpu_custom_call.1} parent=0
    _
  %s12 = ssub.s32 1, %s10
  %s13 = scalar_select 0, %s12, %s10
  $region1: #{tpu_custom_call.1} parent=0
    #allocation2 [shape = 'u8[4096]{0}', space=vmem, size = 0x1000, scoped, tag = 'input window, operand 1, single buffered']
    #allocation3 [shape = 's32[1]{0}', space=sflag, size = 0x4, scoped, tag = 'scoped memory for tpu_custom_call.1']
    #allocation4 [shape = 'u8[65536]{0}', space=vmem, size = 0x10000, scoped, tag = 'input window, operand 5, single buffered']
    #allocation5 [shape = 's32[1]{0}', space=sflag, size = 0x4, scoped, tag = 'scoped memory for tpu_custom_call.1']
    %14 = vsyncpa [#allocation3], 0
    %15 = vsyncpa [#allocation5], 0
    // Predicated region
    $region2: #{tpu_custom_call.1} parent=1 // pred_check
      _
    $region3: #{tpu_custom_call.1} parent=1 // pred_check_branch
      %17 = sbr.rel (0) target = $region5
    $region4: #{tpu_custom_call.1} parent=1 // pred_region
      _
    $region5: #{tpu_custom_call.1} parent=1 // pred_fallthru
      _
    // Predicated region
    $region6: #{tpu_custom_call.1} parent=1 // pred_check
      _
    $region7: #{tpu_custom_call.1} parent=1 // pred_check_branch
      %19 = sbr.rel (0) target = $region9
    $region8: #{tpu_custom_call.1} parent=1 // pred_region
      %s21 = ssub.s32 128, 128
      %22 = vsyncadd [#allocation3], %s21
      %s24 = sshll.u32 [#allocation2], 4
      %s25 = int_to_ptr.vmem [resolvable:$true] %s24
      %27 = dma.hbm_to_vmem [thread:$0]  %s1, 128, %s25, [#allocation3]
    $region9: #{tpu_custom_call.1} parent=1 // pred_fallthru
      _
    // Predicated region
    $region10: #{tpu_custom_call.1} parent=1 // pred_check
      _
    $region11: #{tpu_custom_call.1} parent=1 // pred_check_branch
      %29 = sbr.rel (0) target = $region13
    $region12: #{tpu_custom_call.1} parent=1 // pred_region
      _
    $region13: #{tpu_custom_call.1} parent=1 // pred_fallthru
      _
    // Predicated region
    $region14: #{tpu_custom_call.1} parent=1 // pred_check
      _
    $region15: #{tpu_custom_call.1} parent=1 // pred_check_branch
      %31 = sbr.rel (0) target = $region17
    $region16: #{tpu_custom_call.1} parent=1 // pred_region
      _
    $region17: #{tpu_custom_call.1} parent=1 // pred_fallthru
      _
    // Predicated region
    $region18: #{tpu_custom_call.1} parent=1 // pred_check
      _
    $region19: #{tpu_custom_call.1} parent=1 // pred_check_branch
      %33 = sbr.rel (0) target = $region21
    $region20: #{tpu_custom_call.1} parent=1 // pred_region
      _
    $region21: #{tpu_custom_call.1} parent=1 // pred_fallthru
      _
    // Predicated region
    $region22: #{tpu_custom_call.1} parent=1 // pred_check
      _
    $region23: #{tpu_custom_call.1} parent=1 // pred_check_branch
      %35 = sbr.rel (0) target = $region25
    $region24: #{tpu_custom_call.1} parent=1 // pred_region
      %s37 = ssub.s32 2048, 2048
      %38 = vsyncadd [#allocation5], %s37
      %s39 = sshll.u32 [#allocation4], 4
      %s40 = int_to_ptr.vmem [resolvable:$true] %s39
      %45 = dma.hbm_to_vmem [thread:$0]  %s5, 2048, %s40, [#allocation5], 128, 128, 8
    $region25: #{tpu_custom_call.1} parent=1 // pred_fallthru
      _
    // Predicated region
    $region26: #{tpu_custom_call.1} parent=1 // pred_check
      _
    $region27: #{tpu_custom_call.1} parent=1 // pred_check_branch
      %47 = sbr.rel (0) target = $region29
    $region28: #{tpu_custom_call.1} parent=1 // pred_region
      _
    $region29: #{tpu_custom_call.1} parent=1 // pred_fallthru
      _
    // Predicated region
    $region30: #{tpu_custom_call.1} parent=1 // pred_check
      _
    $region31: #{tpu_custom_call.1} parent=1 // pred_check_branch
      %49 = sbr.rel (0) target = $region33
    $region32: #{tpu_custom_call.1} parent=1 // pred_region
      _
    $region33: #{tpu_custom_call.1} parent=1 // pred_fallthru
      _
    // Predicated region
    $region34: #{tpu_custom_call.1} parent=1 // pred_check
      _
    $region35: #{tpu_custom_call.1} parent=1 // pred_check_branch
      %51 = sbr.rel (0) target = $region37
    $region36: #{tpu_custom_call.1} parent=1 // pred_region
      _
    $region37: #{tpu_custom_call.1} parent=1 // pred_fallthru
      _
    // Predicated region
    $region38: #{tpu_custom_call.1} parent=1 // pred_check
      _
    $region39: #{tpu_custom_call.1} parent=1 // pred_check_branch
      %53 = sbr.rel (0) target = $region41
    $region40: #{tpu_custom_call.1} parent=1 // pred_region
      %54 = dma.done [#allocation3], 128
    $region41: #{tpu_custom_call.1} parent=1 // pred_fallthru
      _
    // Predicated region
    $region42: #{tpu_custom_call.1} parent=1 // pred_check
      _
    $region43: #{tpu_custom_call.1} parent=1 // pred_check_branch
      %56 = sbr.rel (0) target = $region45
    $region44: #{tpu_custom_call.1} parent=1 // pred_region
      %57 = dma.done [#allocation5], 2048
    $region45: #{tpu_custom_call.1} parent=1 // pred_fallthru
      _
    %v58 = vld [vmem:[%s0] sm:$0xff]
    %v59 = vld [vmem:[#allocation2] sm:$0xff]
    %v60 = vld [vmem:[%s2] sm:$0x1]
    %v62 = vlaneseq
    %v63 = vshrl.u32 %v62, 7
    %v64 = vsub.s32 0, %v63
    %v65 = vrot.slane %v60, %v64
    %vm67 = vcmask 64512
    %v69 = vsel %vm67, %v58, 0
    %71 = vmatprep.subr.mxu0 0.0
    %72 = vmatpush1.msra.mxu0 %v59
    %73 = vmatprep.subr.mxu0 0.0
    %74 = vmatpush1.msra.mxu0 0.0
    %75 = vmatprep.subr.mxu0 0.0
    %76 = vmatpush1.msra.mxu0 0.0
    %77 = vmatprep.subr.mxu0 0.0
    %78 = vmatpush1.msra.mxu0 0.0
    %79 = vmatprep.subr.mxu0 0.0
    %80 = vmatpush1.msra.mxu0 0.0
    %81 = vmatprep.subr.mxu0 0.0
    %82 = vmatpush1.msra.mxu0 0.0
    %83 = vmatprep.subr.mxu0 0.0
    %84 = vmatpush1.msra.mxu0 0.0
    %85 = vmatprep.subr.mxu0 0.0
    %86 = vmatpush1.msra.mxu0 0.0
    %87 = vmatprep.subr.mxu0 0.0
    %88 = vmatpush1.msra.mxu0 0.0
    %89 = vmatprep.subr.mxu0 0.0
    %90 = vmatpush1.msra.mxu0 0.0
    %91 = vmatprep.subr.mxu0 0.0
    %92 = vmatpush1.msra.mxu0 0.0
    %93 = vmatprep.subr.mxu0 0.0
    %94 = vmatpush1.msra.mxu0 0.0
    %95 = vmatprep.subr.mxu0 0.0
    %96 = vmatpush1.msra.mxu0 0.0
    %97 = vmatprep.subr.mxu0 0.0
    %98 = vmatpush1.msra.mxu0 0.0
    %99 = vmatprep.subr.mxu0 0.0
    %100 = vmatpush1.msra.mxu0 0.0
    %101 = vmatprep.subr.mxu0 0.0
    %102 = vmatpush1.msra.mxu0 0.0
    %103 = vmatprep.subr.mxu0 0.0
    %104 = vmatpush1.msra.mxu0 0.0
    %105 = vmatprep.subr.mxu0 0.0
    %106 = vmatpush1.msra.mxu0 0.0
    %107 = vmatprep.subr.mxu0 0.0
    %108 = vmatpush1.msra.mxu0 0.0
    %109 = vmatprep.subr.mxu0 0.0
    %110 = vmatpush1.msra.mxu0 0.0
    %111 = vmatprep.subr.mxu0 0.0
    %112 = vmatpush1.msra.mxu0 0.0
    %113 = vmatprep.subr.mxu0 0.0
    %114 = vmatpush1.msra.mxu0 0.0
    %115 = vmatprep.subr.mxu0 0.0
    %116 = vmatpush1.msra.mxu0 0.0
    %117 = vmatprep.subr.mxu0 0.0
    %118 = vmatpush1.msra.mxu0 0.0
    %119 = vmatprep.subr.mxu0 0.0
    %120 = vmatpush1.msra.mxu0 0.0
    %121 = vmatprep.subr.mxu0 0.0
    %122 = vmatpush1.msra.mxu0 0.0
    %123 = vmatprep.subr.mxu0 0.0
    %124 = vmatpush1.msra.mxu0 0.0
    %125 = vmatprep.subr.mxu0 0.0
    %126 = vmatpush1.msra.mxu0 0.0
    %127 = vmatprep.subr.mxu0 0.0
    %128 = vmatpush1.msra.mxu0 0.0
    %129 = vmatprep.subr.mxu0 0.0
    %130 = vmatpush1.msra.mxu0 0.0
    %131 = vmatprep.subr.mxu0 0.0
    %132 = vmatpush1.msra.mxu0 0.0
    %133 = vmatprep.subr.mxu0 0.0
    %134 = vmatpush1.msra.mxu0 0.0
    %135 = vmatprep.mubr.f32.mxu0 0.0
    %136 = vmatmul.mubr.f32.gmra.mrb[0].mxu0 %v69
    %v137 = vpop.f32.mrb[0].mxu0
    %v138 = vadd.f32 %v65, %v137
    %v139 = vpop.f32.mrb[0].mxu0
    %140 = vdwg.mxu0
    %v141 = vmax.f32 %v138, 0.0
    %v142 = vld [vmem:[%s3] sm:$0xff]
    %v143 = vld [vmem:[%s3 + $0x8] sm:$0xff]
    %v144 = vld [vmem:[%s3 + $0x10] sm:$0xff]
    %v145 = vld [vmem:[%s3 + $0x18] sm:$0xff]
    %v146 = vld [vmem:[%s3 + $0x20] sm:$0xff]
    %v147 = vld [vmem:[%s3 + $0x28] sm:$0xff]
    %v148 = vld [vmem:[%s3 + $0x30] sm:$0xff]
    %v149 = vld [vmem:[%s3 + $0x38] sm:$0xff]
    %v150 = vld [vmem:[%s3 + $0x40] sm:$0xff]
    %v151 = vld [vmem:[%s3 + $0x48] sm:$0xff]
    %v152 = vld [vmem:[%s3 + $0x50] sm:$0xff]
    %v153 = vld [vmem:[%s3 + $0x58] sm:$0xff]
    %v154 = vld [vmem:[%s3 + $0x60] sm:$0xff]
    %v155 = vld [vmem:[%s3 + $0x68] sm:$0xff]
    %v156 = vld [vmem:[%s3 + $0x70] sm:$0xff]
    %v157 = vld [vmem:[%s3 + $0x78] sm:$0xff]
    %v158 = vld [vmem:[%s4] sm:$0x1]
    %v160 = vlaneseq
    %v161 = vshrl.u32 %v160, 7
    %v162 = vsub.s32 0, %v161
    %v163 = vrot.slane %v158, %v162
    %165 = vmatprep.subr.mxu0 0.0
    %166 = vmatpush1.msra.mxu0 %v142
    %167 = vmatprep.subr.mxu0 0.0
    %168 = vmatpush1.msra.mxu0 %v143
    %169 = vmatprep.subr.mxu0 0.0
    %170 = vmatpush1.msra.mxu0 %v144
    %171 = vmatprep.subr.mxu0 0.0
    %172 = vmatpush1.msra.mxu0 %v145
    %173 = vmatprep.subr.mxu0 0.0
    %174 = vmatpush1.msra.mxu0 %v146
    %175 = vmatprep.subr.mxu0 0.0
    %176 = vmatpush1.msra.mxu0 %v147
    %177 = vmatprep.subr.mxu0 0.0
    %178 = vmatpush1.msra.mxu0 %v148
    %179 = vmatprep.subr.mxu0 0.0
    %180 = vmatpush1.msra.mxu0 %v149
    %181 = vmatprep.subr.mxu0 0.0
    %182 = vmatpush1.msra.mxu0 %v150
    %183 = vmatprep.subr.mxu0 0.0
    %184 = vmatpush1.msra.mxu0 %v151
    %185 = vmatprep.subr.mxu0 0.0
    %186 = vmatpush1.msra.mxu0 %v152
    %187 = vmatprep.subr.mxu0 0.0
    %188 = vmatpush1.msra.mxu0 %v153
    %189 = vmatprep.subr.mxu0 0.0
    %190 = vmatpush1.msra.mxu0 %v154
    %191 = vmatprep.subr.mxu0 0.0
    %192 = vmatpush1.msra.mxu0 %v155
    %193 = vmatprep.subr.mxu0 0.0
    %194 = vmatpush1.msra.mxu0 %v156
    %195 = vmatprep.subr.mxu0 0.0
    %196 = vmatpush1.msra.mxu0 %v157
    %197 = vmatprep.subr.mxu0 0.0
    %198 = vmatpush1.msra.mxu0 0.0
    %199 = vmatprep.subr.mxu0 0.0
    %200 = vmatpush1.msra.mxu0 0.0
    %201 = vmatprep.subr.mxu0 0.0
    %202 = vmatpush1.msra.mxu0 0.0
    %203 = vmatprep.subr.mxu0 0.0
    %204 = vmatpush1.msra.mxu0 0.0
    %205 = vmatprep.subr.mxu0 0.0
    %206 = vmatpush1.msra.mxu0 0.0
    %207 = vmatprep.subr.mxu0 0.0
    %208 = vmatpush1.msra.mxu0 0.0
    %209 = vmatprep.subr.mxu0 0.0
    %210 = vmatpush1.msra.mxu0 0.0
    %211 = vmatprep.subr.mxu0 0.0
    %212 = vmatpush1.msra.mxu0 0.0
    %213 = vmatprep.subr.mxu0 0.0
    %214 = vmatpush1.msra.mxu0 0.0
    %215 = vmatprep.subr.mxu0 0.0
    %216 = vmatpush1.msra.mxu0 0.0
    %217 = vmatprep.subr.mxu0 0.0
    %218 = vmatpush1.msra.mxu0 0.0
    %219 = vmatprep.subr.mxu0 0.0
    %220 = vmatpush1.msra.mxu0 0.0
    %221 = vmatprep.subr.mxu0 0.0
    %222 = vmatpush1.msra.mxu0 0.0
    %223 = vmatprep.subr.mxu0 0.0
    %224 = vmatpush1.msra.mxu0 0.0
    %225 = vmatprep.subr.mxu0 0.0
    %226 = vmatpush1.msra.mxu0 0.0
    %227 = vmatprep.subr.mxu0 0.0
    %228 = vmatpush1.msra.mxu0 0.0
    %229 = vmatprep.mubr.f32.mxu0 0.0
    %230 = vmatmul.mubr.f32.gmra.mrb[0].mxu0 %v141
    %v231 = vpop.f32.mrb[0].mxu0
    %v232 = vadd.f32 %v163, %v231
    %v233 = vpop.f32.mrb[0].mxu0
    %234 = vdwg.mxu0
    %v235 = vmax.f32 %v232, 0.0
    %v236 = vld [vmem:[#allocation4] sm:$0xff]
    %v237 = vld [vmem:[#allocation4 + $0x8] sm:$0xff]
    %v238 = vld [vmem:[#allocation4 + $0x10] sm:$0xff]
    %v239 = vld [vmem:[#allocation4 + $0x18] sm:$0xff]
    %v240 = vld [vmem:[#allocation4 + $0x20] sm:$0xff]
    %v241 = vld [vmem:[#allocation4 + $0x28] sm:$0xff]
    %v242 = vld [vmem:[#allocation4 + $0x30] sm:$0xff]
    %v243 = vld [vmem:[#allocation4 + $0x38] sm:$0xff]
    %v244 = vld [vmem:[#allocation4 + $0x40] sm:$0xff]
    %v245 = vld [vmem:[#allocation4 + $0x48] sm:$0xff]
    %v246 = vld [vmem:[#allocation4 + $0x50] sm:$0xff]
    %v247 = vld [vmem:[#allocation4 + $0x58] sm:$0xff]
    %v248 = vld [vmem:[#allocation4 + $0x60] sm:$0xff]
    %v249 = vld [vmem:[#allocation4 + $0x68] sm:$0xff]
    %v250 = vld [vmem:[#allocation4 + $0x70] sm:$0xff]
    %v251 = vld [vmem:[#allocation4 + $0x78] sm:$0xff]
    %v252 = vld [vmem:[%s6] sm:$0x1]
    %v254 = vlaneseq
    %v255 = vshrl.u32 %v254, 7
    %v256 = vsub.s32 0, %v255
    %v257 = vrot.slane %v252, %v256
    %259 = vmatprep.subr.mxu0 0.0
    %260 = vmatpush1.msra.mxu0 %v236
    %261 = vmatprep.subr.mxu0 0.0
    %262 = vmatpush1.msra.mxu0 %v237
    %263 = vmatprep.subr.mxu0 0.0
    %264 = vmatpush1.msra.mxu0 %v238
    %265 = vmatprep.subr.mxu0 0.0
    %266 = vmatpush1.msra.mxu0 %v239
    %267 = vmatprep.subr.mxu0 0.0
    %268 = vmatpush1.msra.mxu0 %v240
    %269 = vmatprep.subr.mxu0 0.0
    %270 = vmatpush1.msra.mxu0 %v241
    %271 = vmatprep.subr.mxu0 0.0
    %272 = vmatpush1.msra.mxu0 %v242
    %273 = vmatprep.subr.mxu0 0.0
    %274 = vmatpush1.msra.mxu0 %v243
    %275 = vmatprep.subr.mxu0 0.0
    %276 = vmatpush1.msra.mxu0 %v244
    %277 = vmatprep.subr.mxu0 0.0
    %278 = vmatpush1.msra.mxu0 %v245
    %279 = vmatprep.subr.mxu0 0.0
    %280 = vmatpush1.msra.mxu0 %v246
    %281 = vmatprep.subr.mxu0 0.0
    %282 = vmatpush1.msra.mxu0 %v247
    %283 = vmatprep.subr.mxu0 0.0
    %284 = vmatpush1.msra.mxu0 %v248
    %285 = vmatprep.subr.mxu0 0.0
    %286 = vmatpush1.msra.mxu0 %v249
    %287 = vmatprep.subr.mxu0 0.0
    %288 = vmatpush1.msra.mxu0 %v250
    %289 = vmatprep.subr.mxu0 0.0
    %290 = vmatpush1.msra.mxu0 %v251
    %291 = vmatprep.subr.mxu0 0.0
    %292 = vmatpush1.msra.mxu0 0.0
    %293 = vmatprep.subr.mxu0 0.0
    %294 = vmatpush1.msra.mxu0 0.0
    %295 = vmatprep.subr.mxu0 0.0
    %296 = vmatpush1.msra.mxu0 0.0
    %297 = vmatprep.subr.mxu0 0.0
    %298 = vmatpush1.msra.mxu0 0.0
    %299 = vmatprep.subr.mxu0 0.0
    %300 = vmatpush1.msra.mxu0 0.0
    %301 = vmatprep.subr.mxu0 0.0
    %302 = vmatpush1.msra.mxu0 0.0
    %303 = vmatprep.subr.mxu0 0.0
    %304 = vmatpush1.msra.mxu0 0.0
    %305 = vmatprep.subr.mxu0 0.0
    %306 = vmatpush1.msra.mxu0 0.0
    %307 = vmatprep.subr.mxu0 0.0
    %308 = vmatpush1.msra.mxu0 0.0
    %309 = vmatprep.subr.mxu0 0.0
    %310 = vmatpush1.msra.mxu0 0.0
    %311 = vmatprep.subr.mxu0 0.0
    %312 = vmatpush1.msra.mxu0 0.0
    %313 = vmatprep.subr.mxu0 0.0
    %314 = vmatpush1.msra.mxu0 0.0
    %315 = vmatprep.subr.mxu0 0.0
    %316 = vmatpush1.msra.mxu0 0.0
    %317 = vmatprep.subr.mxu0 0.0
    %318 = vmatpush1.msra.mxu0 0.0
    %319 = vmatprep.subr.mxu0 0.0
    %320 = vmatpush1.msra.mxu0 0.0
    %321 = vmatprep.subr.mxu0 0.0
    %322 = vmatpush1.msra.mxu0 0.0
    %323 = vmatprep.mubr.f32.mxu0 0.0
    %324 = vmatmul.mubr.f32.gmra.mrb[0].mxu0 %v235
    %v325 = vpop.f32.mrb[0].mxu0
    %v326 = vadd.f32 %v257, %v325
    %v327 = vpop.f32.mrb[0].mxu0
    %328 = vdwg.mxu0
    %v329 = vmax.f32 %v326, 0.0
    %v330 = vld [vmem:[%s7] sm:$0xff]
    %v331 = vld [vmem:[%s7 + $0x8] sm:$0xff]
    %v332 = vld [vmem:[%s7 + $0x10] sm:$0xff]
    %v333 = vld [vmem:[%s7 + $0x18] sm:$0xff]
    %v334 = vld [vmem:[%s7 + $0x20] sm:$0xff]
    %v335 = vld [vmem:[%s7 + $0x28] sm:$0xff]
    %v336 = vld [vmem:[%s7 + $0x30] sm:$0xff]
    %v337 = vld [vmem:[%s7 + $0x38] sm:$0xff]
    %v338 = vld [vmem:[%s7 + $0x40] sm:$0xff]
    %v339 = vld [vmem:[%s7 + $0x48] sm:$0xff]
    %v340 = vld [vmem:[%s7 + $0x50] sm:$0xff]
    %v341 = vld [vmem:[%s7 + $0x58] sm:$0xff]
    %v342 = vld [vmem:[%s7 + $0x60] sm:$0xff]
    %v343 = vld [vmem:[%s7 + $0x68] sm:$0xff]
    %v344 = vld [vmem:[%s7 + $0x70] sm:$0xff]
    %v345 = vld [vmem:[%s7 + $0x78] sm:$0xff]
    %v346 = vld [vmem:[%s8] sm:$0x1]
    %v348 = vlaneseq
    %v349 = vshrl.u32 %v348, 7
    %v350 = vsub.s32 0, %v349
    %v351 = vrot.slane %v346, %v350
    %353 = vmatprep.subr.mxu0 0.0
    %354 = vmatpush1.msra.mxu0 %v330
    %355 = vmatprep.subr.mxu0 0.0
    %356 = vmatpush1.msra.mxu0 %v331
    %357 = vmatprep.subr.mxu0 0.0
    %358 = vmatpush1.msra.mxu0 %v332
    %359 = vmatprep.subr.mxu0 0.0
    %360 = vmatpush1.msra.mxu0 %v333
    %361 = vmatprep.subr.mxu0 0.0
    %362 = vmatpush1.msra.mxu0 %v334
    %363 = vmatprep.subr.mxu0 0.0
    %364 = vmatpush1.msra.mxu0 %v335
    %365 = vmatprep.subr.mxu0 0.0
    %366 = vmatpush1.msra.mxu0 %v336
    %367 = vmatprep.subr.mxu0 0.0
    %368 = vmatpush1.msra.mxu0 %v337
    %369 = vmatprep.subr.mxu0 0.0
    %370 = vmatpush1.msra.mxu0 %v338
    %371 = vmatprep.subr.mxu0 0.0
    %372 = vmatpush1.msra.mxu0 %v339
    %373 = vmatprep.subr.mxu0 0.0
    %374 = vmatpush1.msra.mxu0 %v340
    %375 = vmatprep.subr.mxu0 0.0
    %376 = vmatpush1.msra.mxu0 %v341
    %377 = vmatprep.subr.mxu0 0.0
    %378 = vmatpush1.msra.mxu0 %v342
    %379 = vmatprep.subr.mxu0 0.0
    %380 = vmatpush1.msra.mxu0 %v343
    %381 = vmatprep.subr.mxu0 0.0
    %382 = vmatpush1.msra.mxu0 %v344
    %383 = vmatprep.subr.mxu0 0.0
    %384 = vmatpush1.msra.mxu0 %v345
    %385 = vmatprep.subr.mxu0 0.0
    %386 = vmatpush1.msra.mxu0 0.0
    %387 = vmatprep.subr.mxu0 0.0
    %388 = vmatpush1.msra.mxu0 0.0
    %389 = vmatprep.subr.mxu0 0.0
    %390 = vmatpush1.msra.mxu0 0.0
    %391 = vmatprep.subr.mxu0 0.0
    %392 = vmatpush1.msra.mxu0 0.0
    %393 = vmatprep.subr.mxu0 0.0
    %394 = vmatpush1.msra.mxu0 0.0
    %395 = vmatprep.subr.mxu0 0.0
    %396 = vmatpush1.msra.mxu0 0.0
    %397 = vmatprep.subr.mxu0 0.0
    %398 = vmatpush1.msra.mxu0 0.0
    %399 = vmatprep.subr.mxu0 0.0
    %400 = vmatpush1.msra.mxu0 0.0
    %401 = vmatprep.subr.mxu0 0.0
    %402 = vmatpush1.msra.mxu0 0.0
    %403 = vmatprep.subr.mxu0 0.0
    %404 = vmatpush1.msra.mxu0 0.0
    %405 = vmatprep.subr.mxu0 0.0
    %406 = vmatpush1.msra.mxu0 0.0
    %407 = vmatprep.subr.mxu0 0.0
    %408 = vmatpush1.msra.mxu0 0.0
    %409 = vmatprep.subr.mxu0 0.0
    %410 = vmatpush1.msra.mxu0 0.0
    %411 = vmatprep.subr.mxu0 0.0
    %412 = vmatpush1.msra.mxu0 0.0
    %413 = vmatprep.subr.mxu0 0.0
    %414 = vmatpush1.msra.mxu0 0.0
    %415 = vmatprep.subr.mxu0 0.0
    %416 = vmatpush1.msra.mxu0 0.0
    %417 = vmatprep.mubr.f32.mxu0 0.0
    %418 = vmatmul.mubr.f32.gmra.mrb[0].mxu0 %v329
    %v419 = vpop.f32.mrb[0].mxu0
    %v420 = vadd.f32 %v351, %v419
    %v421 = vpop.f32.mrb[0].mxu0
    %422 = vdwg.mxu0
    %vm423 = vcmask 31744
    %424 = vst.msk [vmem:[%s9] sm:$0xff] %vm423, %v420
    // Predicated region
    $region46: #{tpu_custom_call.1} parent=1 // pred_check
      _
    $region47: #{tpu_custom_call.1} parent=1 // pred_check_branch
      %426 = sbr.rel (0) target = $region49
    $region48: #{tpu_custom_call.1} parent=1 // pred_region
      _
    $region49: #{tpu_custom_call.1} parent=1 // pred_fallthru
      _
    // Predicated region
    $region50: #{tpu_custom_call.1} parent=1 // pred_check
      _
    $region51: #{tpu_custom_call.1} parent=1 // pred_check_branch
      %428 = sbr.rel (0) target = $region53
    $region52: #{tpu_custom_call.1} parent=1 // pred_region
      _
    $region53: #{tpu_custom_call.1} parent=1 // pred_fallthru
      _
    %429 = vsyncpa [#allocation3], 1
    %430 = vsyncpa [#allocation5], 1

</llo_original>
